<compile_context>
chip_gen: v7x
topology: tpu7x:2x2x1
jax: 0.10.0
libtpu: 0.0.40
codegen_flags: <defaults>
</compile_context>

<pallas_src>
import jax
import jax.numpy as jnp
from jax.experimental import pallas as pl
from jax.experimental.pallas import tpu as pltpu


def _round_up(a, m):
    return (a + m - 1) // m * m


def _ae_kernel(x_ref, we_ref, be_ref, wd_ref, bd_ref, o_ref):
    # Encoder: x @ W_enc + b_enc -> tanh (default_activation). f32 accumulate;
    # bias add + tanh in f32 (v5e has no bf16 VPU/EUP path).
    h = jnp.dot(x_ref[...], we_ref[...], preferred_element_type=jnp.float32)
    h = jnp.tanh(h + be_ref[...])
    # Decoder: linear (decoder='linear' => no activation).
    y = jnp.dot(h.astype(wd_ref.dtype), wd_ref[...],
                preferred_element_type=jnp.float32)
    y = y + bd_ref[...]
    o_ref[...] = y.astype(o_ref.dtype)


def autoencoder_forward(x, w_enc, b_enc, w_dec, b_dec, *,
                        block_m=512, compute_dtype=None,
                        vmem_budget_bytes=40 * 1024 * 1024):
    """AutoEncoder forward: tanh(x @ W_enc + b_enc) @ W_dec + b_dec.

    x     : any shape whose total element count is divisible by n_outer
            (torch: input.view(-1, n_outer)).
    w_enc : (n_outer, n_hid)    b_enc : (1, n_hid)
    w_dec : (n_hid, n_outer)    b_dec : (1, n_outer)
    Returns an array with the same shape/dtype as x (torch: .view_as(input)).
    """
    n_outer, n_hid = w_enc.shape
    assert w_dec.shape == (n_hid, n_outer)
    orig_shape, orig_dtype = x.shape, x.dtype
    assert x.size % n_outer == 0, "input element count must divide n_outer"
    x2d = x.reshape(-1, n_outer)
    M = x2d.shape[0]

    # Optional reduced-precision matmul operands (accumulation stays f32).
    if compute_dtype is not None:
        x2d = x2d.astype(compute_dtype)
        w_enc = w_enc.astype(compute_dtype)
        w_dec = w_dec.astype(compute_dtype)
    b_enc = b_enc.astype(jnp.float32)
    b_dec = b_dec.astype(jnp.float32)
    work_dtype = x2d.dtype
    itemsize = jnp.dtype(work_dtype).itemsize

    # Lane-dense feature dims: pad n_outer / n_hid to multiples of 128.
    n_outer_p = _round_up(n_outer, 128)
    n_hid_p = _round_up(n_hid, 128)

    # Row tile: multiple of 8 sublanes, shrunk until the working set fits the
    # VMEM budget (double-buffered x/out streams + single-buffered weights +
    # f32 hidden intermediate). Safe sizing for v7x's 64 MiB physical VMEM.
    tm = max(8, min(_round_up(block_m, 8), _round_up(M, 8)))

    def _tile_bytes(t):
        stream = 2 * (2 * t * n_outer_p * itemsize)       # x + out, 2-deep pipeline
        resident = 2 * n_outer_p * n_hid_p * itemsize      # W_enc + W_dec, 1 buffer
        interm = t * n_hid_p * 4                           # f32 hidden activations
        return stream + resident + interm

    while tm > 8 and _tile_bytes(tm) > vmem_budget_bytes:
        tm //= 2
    tm = _round_up(tm, 8)
    M_p = _round_up(M, tm)

    # Zero-pad. Padded rows/cols contribute nothing to the valid region
    # (zero weight rows/cols, zero bias pads) and are sliced away below.
    if (M_p, n_outer_p) != (M, n_outer):
        x2d = jnp.pad(x2d, ((0, M_p - M), (0, n_outer_p - n_outer)))
    if (n_outer_p, n_hid_p) != (n_outer, n_hid):
        w_enc = jnp.pad(w_enc, ((0, n_outer_p - n_outer), (0, n_hid_p - n_hid)))
        w_dec = jnp.pad(w_dec, ((0, n_hid_p - n_hid), (0, n_outer_p - n_outer)))
        b_enc = jnp.pad(b_enc, ((0, 0), (0, n_hid_p - n_hid)))
        b_dec = jnp.pad(b_dec, ((0, 0), (0, n_outer_p - n_outer)))

    # Grid-invariant operands: single VMEM buffer (no pointless double-buffer).
    def _resident(shape):
        return pl.BlockSpec(shape, lambda i: (0, 0),
                            pipeline_mode=pl.Buffered(1))

    # TODO(synk): for very large n_outer (>~4K), also tile the encoder K dim
    # with a VMEM accumulator (grid axis "arbitrary", pl.when init/finalize).
    grid = (M_p // tm,)
    out2d = pl.pallas_call(
        _ae_kernel,
        out_shape=jax.ShapeDtypeStruct((M_p, n_outer_p), work_dtype),
        grid=grid,
        in_specs=[
            pl.BlockSpec((tm, n_outer_p), lambda i: (i, 0)),   # x: streamed per tile
            _resident((n_outer_p, n_hid_p)),                   # W_enc
            _resident((1, n_hid_p)),                           # b_enc
            _resident((n_hid_p, n_outer_p)),                   # W_dec
            _resident((1, n_outer_p)),                         # b_dec
        ],
        out_specs=pl.BlockSpec((tm, n_outer_p), lambda i: (i, 0)),
        compiler_params=pltpu.CompilerParams(
            dimension_semantics=("parallel",),   # independent row tiles -> megacore
            vmem_limit_bytes=48 * 1024 * 1024,
        ),
    )(x2d, w_enc, b_enc, w_dec, b_dec)

    out2d = out2d[:M, :n_outer]
    return out2d.reshape(orig_shape).astype(orig_dtype)


def init_params(key, n_outer, n_hid, dtype=jnp.float32):
    """Deterministic init matching nn.Linear's U(-1/sqrt(fan_in), 1/sqrt(fan_in))."""
    k1, k2, k3, k4 = jax.random.split(key, 4)
    lim_e = 1.0 / jnp.sqrt(jnp.asarray(n_outer, dtype))
    lim_d = 1.0 / jnp.sqrt(jnp.asarray(n_hid, dtype))
    w_enc = jax.random.uniform(k1, (n_outer, n_hid), dtype, -lim_e, lim_e)
    b_enc = jax.random.uniform(k2, (1, n_hid), dtype, -lim_e, lim_e)
    w_dec = jax.random.uniform(k3, (n_hid, n_outer), dtype, -lim_d, lim_d)
    b_dec = jax.random.uniform(k4, (1, n_outer), dtype, -lim_d, lim_d)
    return w_enc, b_enc, w_dec, b_dec


if __name__ == "__main__":
    key = jax.random.PRNGKey(0)
    n_outer, n_hid = 16, 8
    kx, kx2, kp = jax.random.split(key, 3)
    w_enc, b_enc, w_dec, b_dec = init_params(kp, n_outer, n_hid)

    def ref_fwd(xx):
        r = jnp.tanh(xx.reshape(-1, n_outer) @ w_enc + b_enc) @ w_dec + b_dec
        return r.reshape(xx.shape)

    # 1) small input, same flatten glue as the PyTorch module
    x = jax.random.normal(kx, (2, 4, n_outer), jnp.float32)
    out = autoencoder_forward(x, w_enc, b_enc, w_dec, b_dec)
    jax.block_until_ready(out)
    assert out.shape == x.shape and out.dtype == x.dtype
    assert jnp.allclose(out, ref_fwd(x), atol=1e-5, rtol=1e-5)

    # 2) M=240 rows with a 64-row tile -> multi-step grid + M padding path
    x2 = jax.random.normal(kx2, (6, 40, n_outer), jnp.float32)
    out2 = autoencoder_forward(x2, w_enc, b_enc, w_dec, b_dec, block_m=64)
    jax.block_until_ready(out2)
    assert jnp.allclose(out2, ref_fwd(x2), atol=1e-5, rtol=1e-5)

    # 3) bf16 operands with f32 accumulation (halves HBM bytes on v6e/v7x)
    out3 = autoencoder_forward(x2, w_enc, b_enc, w_dec, b_dec,
                               block_m=64, compute_dtype=jnp.bfloat16)
    jax.block_until_ready(out3)
    assert jnp.allclose(out3, ref_fwd(x2), atol=2e-2, rtol=2e-2)

    print("KERNEL_OK")
</pallas_src>

<mosaic_0001>
module attributes {stable_mosaic.version = 11 : i64} {
  func.func @_ae_kernel(%arg0: i32, %arg1: memref<8x128xf32, #tpu.memory_space<vmem>>, %arg2: memref<128x128xf32, #tpu.memory_space<vmem>>, %arg3: memref<1x128xf32, #tpu.memory_space<vmem>>, %arg4: memref<128x128xf32, #tpu.memory_space<vmem>>, %arg5: memref<1x128xf32, #tpu.memory_space<vmem>>, %arg6: memref<8x128xf32, #tpu.memory_space<vmem>>) attributes {dimension_semantics = [#tpu.dimension_semantics<parallel>], iteration_bounds = array<i64: 1>, scalar_prefetch = 0 : i64, scratch_operands = 0 : i64, tpu.core_type = #tpu.core_type<tc>, window_params = [{transform_indices = @transform_0, window_bounds = array<i64: 8, 128>}, {pipeline_mode = #tpu.pipeline_mode<synchronous>, transform_indices = @transform_1, window_bounds = array<i64: 128, 128>}, {pipeline_mode = #tpu.pipeline_mode<synchronous>, transform_indices = @transform_2, window_bounds = array<i64: 1, 128>}, {pipeline_mode = #tpu.pipeline_mode<synchronous>, transform_indices = @transform_3, window_bounds = array<i64: 128, 128>}, {pipeline_mode = #tpu.pipeline_mode<synchronous>, transform_indices = @transform_4, window_bounds = array<i64: 1, 128>}, {transform_indices = @transform_5, window_bounds = array<i64: 8, 128>}]} {
    %c0 = arith.constant 0 : index
    %c0_0 = arith.constant 0 : index
    %0 = vector.load %arg1[%c0, %c0_0] : memref<8x128xf32, #tpu.memory_space<vmem>>, vector<8x128xf32>
    %c0_1 = arith.constant 0 : index
    %c0_2 = arith.constant 0 : index
    %1 = vector.load %arg2[%c0_1, %c0_2] : memref<128x128xf32, #tpu.memory_space<vmem>>, vector<128x128xf32>
    %cst = arith.constant dense<0.000000e+00> : vector<8x128xf32>
    %2 = tpu.matmul %0, %1, %cst {dimension_numbers = #tpu.dot_dimension_numbers<[1], [0], [0], [1], [0, 0, 1, 1], [], []>} : vector<8x128xf32>, vector<128x128xf32>, vector<8x128xf32> -> vector<8x128xf32>
    %c0_3 = arith.constant 0 : index
    %c0_4 = arith.constant 0 : index
    %3 = vector.load %arg3[%c0_3, %c0_4] : memref<1x128xf32, #tpu.memory_space<vmem>>, vector<1x128xf32>
    %4 = vector.broadcast %3 : vector<1x128xf32> to vector<8x128xf32>
    %5 = arith.addf %2, %4 : vector<8x128xf32>
    %6 = math.tanh %5 : vector<8x128xf32>
    %c0_5 = arith.constant 0 : index
    %c0_6 = arith.constant 0 : index
    %7 = vector.load %arg4[%c0_5, %c0_6] : memref<128x128xf32, #tpu.memory_space<vmem>>, vector<128x128xf32>
    %cst_7 = arith.constant dense<0.000000e+00> : vector<8x128xf32>
    %8 = tpu.matmul %6, %7, %cst_7 {dimension_numbers = #tpu.dot_dimension_numbers<[1], [0], [0], [1], [0, 0, 1, 1], [], []>} : vector<8x128xf32>, vector<128x128xf32>, vector<8x128xf32> -> vector<8x128xf32>
    %c0_8 = arith.constant 0 : index
    %c0_9 = arith.constant 0 : index
    %9 = vector.load %arg5[%c0_8, %c0_9] : memref<1x128xf32, #tpu.memory_space<vmem>>, vector<1x128xf32>
    %10 = vector.broadcast %9 : vector<1x128xf32> to vector<8x128xf32>
    %11 = arith.addf %8, %10 : vector<8x128xf32>
    %c0_10 = arith.constant 0 : index
    %c0_11 = arith.constant 0 : index
    %12 = vector.load %arg6[%c0_10, %c0_11] : memref<8x128xf32, #tpu.memory_space<vmem>>, vector<8x128xf32>
    tpu.vector_store %arg6[%c0_10, %c0_11], %11 {strides = array<i32>} : memref<8x128xf32, #tpu.memory_space<vmem>>, vector<8x128xf32>,
    return
  }
  func.func @transform_0(%arg0: i32) -> (i32, i32) {
    %c0_i32 = arith.constant 0 : i32
    %c0_i32_0 = arith.constant 0 : i32
    return %arg0, %c0_i32 : i32, i32
  }
  func.func @transform_1(%arg0: i32) -> (i32, i32) {
    %c0_i32 = arith.constant 0 : i32
    %c0_i32_0 = arith.constant 0 : i32
    %c0_i32_1 = arith.constant 0 : i32
    return %c0_i32, %c0_i32_0 : i32, i32
  }
  func.func @transform_2(%arg0: i32) -> (i32, i32) {
    %c0_i32 = arith.constant 0 : i32
    %c0_i32_0 = arith.constant 0 : i32
    %c0_i32_1 = arith.constant 0 : i32
    return %c0_i32, %c0_i32_0 : i32, i32
  }
  func.func @transform_3(%arg0: i32) -> (i32, i32) {
    %c0_i32 = arith.constant 0 : i32
    %c0_i32_0 = arith.constant 0 : i32
    %c0_i32_1 = arith.constant 0 : i32
    return %c0_i32, %c0_i32_0 : i32, i32
  }
  func.func @transform_4(%arg0: i32) -> (i32, i32) {
    %c0_i32 = arith.constant 0 : i32
    %c0_i32_0 = arith.constant 0 : i32
    %c0_i32_1 = arith.constant 0 : i32
    return %c0_i32, %c0_i32_0 : i32, i32
  }
  func.func @transform_5(%arg0: i32) -> (i32, i32) {
    %c0_i32 = arith.constant 0 : i32
    %c0_i32_0 = arith.constant 0 : i32
    return %arg0, %c0_i32 : i32, i32
  }
}

</mosaic_0001>

<llo_original>
// kernel: tpu_custom_call.1
$region0: #{tpu_custom_call.1}
  #allocation0 [shape = 'u32[]', space=smem, size = 0x4, offset = 0x4, fixed_abs, tag = 'smem constant byte address 0x4 - core index']
  #allocation1 [shape = 'u32[144,128]{1,0:T(1,128)}', space=vmem, size = 0x12000, scoped, tag = 'internal scratch']
  %s0 = inlined_call_operand.hbm [shape: f32[8,128], index: 0, kind: input, shape index: {}]
  %s1 = inlined_call_operand.hbm [shape: f32[128,128], index: 1, kind: input, shape index: {}]
  %s2 = inlined_call_operand.vmem [shape: f32[1,128], index: 2, kind: input, shape index: {}]
  %s3 = inlined_call_operand.hbm [shape: f32[128,128], index: 3, kind: input, shape index: {}]
  %s4 = inlined_call_operand.vmem [shape: f32[1,128], index: 4, kind: input, shape index: {}]
  %s5 = inlined_call_operand.hbm [shape: f32[8,128], index: 5, kind: output, shape index: {}]
  %s6 = sld [smem:[#allocation0]]
  $region42: #{tpu_custom_call.1} parent=0
    _
  %s8 = ssub.s32 1, %s6
  %s9 = scalar_select 0, %s8, %s6
  $region1: #{tpu_custom_call.1} parent=0
    #allocation2 [shape = 'u8[4096]{0}', space=vmem, size = 0x1000, scoped, tag = 'input window, operand 0, single buffered']
    #allocation3 [shape = 's32[1]{0}', space=sflag, size = 0x4, scoped, tag = 'scoped memory for tpu_custom_call.1']
    #allocation4 [shape = 's32[1]{0}', space=sflag, size = 0x4, scoped, tag = 'scoped memory for tpu_custom_call.1']
    #allocation5 [shape = 'u8[65536]{0}', space=vmem, size = 0x10000, scoped, tag = 'input window, operand 1, single buffered']
    #allocation6 [shape = 's32[1]{0}', space=sflag, size = 0x4, scoped, tag = 'scoped memory for tpu_custom_call.1']
    #allocation7 [shape = 'u8[65536]{0}', space=vmem, size = 0x10000, scoped, tag = 'input window, operand 3, single buffered']
    #allocation8 [shape = 'u8[4096]{0}', space=vmem, size = 0x1000, scoped, tag = 'output window, operand 0, single buffered']
    %10 = vsyncpa [#allocation3], 0
    %11 = vsyncpa [#allocation6], 0
    %12 = vsyncpa [#allocation4], 0
    // Predicated region
    $region2: #{tpu_custom_call.1} parent=1 // pred_check
      _
    $region3: #{tpu_custom_call.1} parent=1 // pred_check_branch
      %14 = sbr.rel (0) target = $region5
    $region4: #{tpu_custom_call.1} parent=1 // pred_region
      %s16 = ssub.s32 128, 128
      %17 = vsyncadd [#allocation3], %s16
      %s19 = sshll.u32 [#allocation2], 4
      %s20 = int_to_ptr.vmem [resolvable:$true] %s19
      %22 = dma.hbm_to_vmem [thread:$0]  %s0, 128, %s20, [#allocation3]
    $region5: #{tpu_custom_call.1} parent=1 // pred_fallthru
      _
    // Predicated region
    $region6: #{tpu_custom_call.1} parent=1 // pred_check
      _
    $region7: #{tpu_custom_call.1} parent=1 // pred_check_branch
      %24 = sbr.rel (0) target = $region9
    $region8: #{tpu_custom_call.1} parent=1 // pred_region
      %s26 = ssub.s32 2048, 2048
      %27 = vsyncadd [#allocation6], %s26
      %s28 = sshll.u32 [#allocation5], 4
      %s29 = int_to_ptr.vmem [resolvable:$true] %s28
      %34 = dma.hbm_to_vmem [thread:$0]  %s1, 2048, %s29, [#allocation6], 128, 128, 8
    $region9: #{tpu_custom_call.1} parent=1 // pred_fallthru
      _
    // Predicated region
    $region10: #{tpu_custom_call.1} parent=1 // pred_check
      _
    $region11: #{tpu_custom_call.1} parent=1 // pred_check_branch
      %36 = sbr.rel (0) target = $region13
    $region12: #{tpu_custom_call.1} parent=1 // pred_region
      _
    $region13: #{tpu_custom_call.1} parent=1 // pred_fallthru
      _
    // Predicated region
    $region14: #{tpu_custom_call.1} parent=1 // pred_check
      _
    $region15: #{tpu_custom_call.1} parent=1 // pred_check_branch
      %38 = sbr.rel (0) target = $region17
    $region16: #{tpu_custom_call.1} parent=1 // pred_region
      %s40 = ssub.s32 2048, 2048
      %41 = vsyncadd [#allocation6], %s40
      %s42 = sshll.u32 [#allocation7], 4
      %s43 = int_to_ptr.vmem [resolvable:$true] %s42
      %48 = dma.hbm_to_vmem [thread:$0]  %s3, 2048, %s43, [#allocation6], 128, 128, 8
    $region17: #{tpu_custom_call.1} parent=1 // pred_fallthru
      _
    // Predicated region
    $region18: #{tpu_custom_call.1} parent=1 // pred_check
      _
    $region19: #{tpu_custom_call.1} parent=1 // pred_check_branch
      %50 = sbr.rel (0) target = $region21
    $region20: #{tpu_custom_call.1} parent=1 // pred_region
      _
    $region21: #{tpu_custom_call.1} parent=1 // pred_fallthru
      _
    // Predicated region
    $region22: #{tpu_custom_call.1} parent=1 // pred_check
      _
    $region23: #{tpu_custom_call.1} parent=1 // pred_check_branch
      %52 = sbr.rel (0) target = $region25
    $region24: #{tpu_custom_call.1} parent=1 // pred_region
      %53 = dma.done [#allocation3], 128
    $region25: #{tpu_custom_call.1} parent=1 // pred_fallthru
      _
    // Predicated region
    $region26: #{tpu_custom_call.1} parent=1 // pred_check
      _
    $region27: #{tpu_custom_call.1} parent=1 // pred_check_branch
      %55 = sbr.rel (0) target = $region29
    $region28: #{tpu_custom_call.1} parent=1 // pred_region
      %56 = dma.done [#allocation6], 2048
    $region29: #{tpu_custom_call.1} parent=1 // pred_fallthru
      _
    // Predicated region
    $region30: #{tpu_custom_call.1} parent=1 // pred_check
      _
    $region31: #{tpu_custom_call.1} parent=1 // pred_check_branch
      %58 = sbr.rel (0) target = $region33
    $region32: #{tpu_custom_call.1} parent=1 // pred_region
      %59 = dma.done [#allocation6], 2048
    $region33: #{tpu_custom_call.1} parent=1 // pred_fallthru
      _
    %v60 = vld [vmem:[#allocation2] sm:$0xff]
    %v61 = vld [vmem:[#allocation5] sm:$0xff]
    %v62 = vld [vmem:[#allocation5 + $0x8] sm:$0xff]
    %v63 = vld [vmem:[#allocation5 + $0x10] sm:$0xff]
    %v64 = vld [vmem:[#allocation5 + $0x18] sm:$0xff]
    %v65 = vld [vmem:[#allocation5 + $0x20] sm:$0xff]
    %v66 = vld [vmem:[#allocation5 + $0x28] sm:$0xff]
    %v67 = vld [vmem:[#allocation5 + $0x30] sm:$0xff]
    %v68 = vld [vmem:[#allocation5 + $0x38] sm:$0xff]
    %v69 = vld [vmem:[#allocation5 + $0x40] sm:$0xff]
    %v70 = vld [vmem:[#allocation5 + $0x48] sm:$0xff]
    %v71 = vld [vmem:[#allocation5 + $0x50] sm:$0xff]
    %v72 = vld [vmem:[#allocation5 + $0x58] sm:$0xff]
    %v73 = vld [vmem:[#allocation5 + $0x60] sm:$0xff]
    %v74 = vld [vmem:[#allocation5 + $0x68] sm:$0xff]
    %v75 = vld [vmem:[#allocation5 + $0x70] sm:$0xff]
    %v76 = vld [vmem:[#allocation5 + $0x78] sm:$0xff]
    %v77 = vld [vmem:[%s2] sm:$0x1]
    %v79 = vlaneseq
    %v80 = vshrl.u32 %v79, 7
    %v81 = vsub.s32 0, %v80
    %v82 = vrot.slane %v77, %v81
    %84 = vmatprep.subr.mxu0 0.0
    %85 = vmatpush1.msra.mxu0 %v61
    %86 = vmatprep.subr.mxu0 0.0
    %87 = vmatpush1.msra.mxu0 %v62
    %88 = vmatprep.subr.mxu0 0.0
    %89 = vmatpush1.msra.mxu0 %v63
    %90 = vmatprep.subr.mxu0 0.0
    %91 = vmatpush1.msra.mxu0 %v64
    %92 = vmatprep.subr.mxu0 0.0
    %93 = vmatpush1.msra.mxu0 %v65
    %94 = vmatprep.subr.mxu0 0.0
    %95 = vmatpush1.msra.mxu0 %v66
    %96 = vmatprep.subr.mxu0 0.0
    %97 = vmatpush1.msra.mxu0 %v67
    %98 = vmatprep.subr.mxu0 0.0
    %99 = vmatpush1.msra.mxu0 %v68
    %100 = vmatprep.subr.mxu0 0.0
    %101 = vmatpush1.msra.mxu0 %v69
    %102 = vmatprep.subr.mxu0 0.0
    %103 = vmatpush1.msra.mxu0 %v70
    %104 = vmatprep.subr.mxu0 0.0
    %105 = vmatpush1.msra.mxu0 %v71
    %106 = vmatprep.subr.mxu0 0.0
    %107 = vmatpush1.msra.mxu0 %v72
    %108 = vmatprep.subr.mxu0 0.0
    %109 = vmatpush1.msra.mxu0 %v73
    %110 = vmatprep.subr.mxu0 0.0
    %111 = vmatpush1.msra.mxu0 %v74
    %112 = vmatprep.subr.mxu0 0.0
    %113 = vmatpush1.msra.mxu0 %v75
    %114 = vmatprep.subr.mxu0 0.0
    %115 = vmatpush1.msra.mxu0 %v76
    %116 = vmatprep.subr.mxu0 0.0
    %117 = vmatpush1.msra.mxu0 0.0
    %118 = vmatprep.subr.mxu0 0.0
    %119 = vmatpush1.msra.mxu0 0.0
    %120 = vmatprep.subr.mxu0 0.0
    %121 = vmatpush1.msra.mxu0 0.0
    %122 = vmatprep.subr.mxu0 0.0
    %123 = vmatpush1.msra.mxu0 0.0
    %124 = vmatprep.subr.mxu0 0.0
    %125 = vmatpush1.msra.mxu0 0.0
    %126 = vmatprep.subr.mxu0 0.0
    %127 = vmatpush1.msra.mxu0 0.0
    %128 = vmatprep.subr.mxu0 0.0
    %129 = vmatpush1.msra.mxu0 0.0
    %130 = vmatprep.subr.mxu0 0.0
    %131 = vmatpush1.msra.mxu0 0.0
    %132 = vmatprep.subr.mxu0 0.0
    %133 = vmatpush1.msra.mxu0 0.0
    %134 = vmatprep.subr.mxu0 0.0
    %135 = vmatpush1.msra.mxu0 0.0
    %136 = vmatprep.subr.mxu0 0.0
    %137 = vmatpush1.msra.mxu0 0.0
    %138 = vmatprep.subr.mxu0 0.0
    %139 = vmatpush1.msra.mxu0 0.0
    %140 = vmatprep.subr.mxu0 0.0
    %141 = vmatpush1.msra.mxu0 0.0
    %142 = vmatprep.subr.mxu0 0.0
    %143 = vmatpush1.msra.mxu0 0.0
    %144 = vmatprep.subr.mxu0 0.0
    %145 = vmatpush1.msra.mxu0 0.0
    %146 = vmatprep.subr.mxu0 0.0
    %147 = vmatpush1.msra.mxu0 0.0
    %148 = vmatprep.mubr.f32.mxu0 0.0
    %149 = vmatmul.mubr.f32.gmra.mrb[0].mxu0 %v60
    %v150 = vpop.f32.mrb[0].mxu0
    %v151 = vadd.f32 %v82, %v150
    %v152 = vpop.f32.mrb[0].mxu0
    %153 = vdwg.mxu0
    %v154 = vtanh.pop %v151
    %v155 = vld [vmem:[#allocation7] sm:$0xff]
    %v156 = vld [vmem:[#allocation7 + $0x8] sm:$0xff]
    %v157 = vld [vmem:[#allocation7 + $0x10] sm:$0xff]
    %v158 = vld [vmem:[#allocation7 + $0x18] sm:$0xff]
    %v159 = vld [vmem:[#allocation7 + $0x20] sm:$0xff]
    %v160 = vld [vmem:[#allocation7 + $0x28] sm:$0xff]
    %v161 = vld [vmem:[#allocation7 + $0x30] sm:$0xff]
    %v162 = vld [vmem:[#allocation7 + $0x38] sm:$0xff]
    %v163 = vld [vmem:[#allocation7 + $0x40] sm:$0xff]
    %v164 = vld [vmem:[#allocation7 + $0x48] sm:$0xff]
    %v165 = vld [vmem:[#allocation7 + $0x50] sm:$0xff]
    %v166 = vld [vmem:[#allocation7 + $0x58] sm:$0xff]
    %v167 = vld [vmem:[#allocation7 + $0x60] sm:$0xff]
    %v168 = vld [vmem:[#allocation7 + $0x68] sm:$0xff]
    %v169 = vld [vmem:[#allocation7 + $0x70] sm:$0xff]
    %v170 = vld [vmem:[#allocation7 + $0x78] sm:$0xff]
    %v171 = vld [vmem:[%s4] sm:$0x1]
    %v173 = vlaneseq
    %v174 = vshrl.u32 %v173, 7
    %v175 = vsub.s32 0, %v174
    %v176 = vrot.slane %v171, %v175
    %178 = vmatprep.subr.mxu0 0.0
    %179 = vmatpush1.msra.mxu0 %v155
    %180 = vmatprep.subr.mxu0 0.0
    %181 = vmatpush1.msra.mxu0 %v156
    %182 = vmatprep.subr.mxu0 0.0
    %183 = vmatpush1.msra.mxu0 %v157
    %184 = vmatprep.subr.mxu0 0.0
    %185 = vmatpush1.msra.mxu0 %v158
    %186 = vmatprep.subr.mxu0 0.0
    %187 = vmatpush1.msra.mxu0 %v159
    %188 = vmatprep.subr.mxu0 0.0
    %189 = vmatpush1.msra.mxu0 %v160
    %190 = vmatprep.subr.mxu0 0.0
    %191 = vmatpush1.msra.mxu0 %v161
    %192 = vmatprep.subr.mxu0 0.0
    %193 = vmatpush1.msra.mxu0 %v162
    %194 = vmatprep.subr.mxu0 0.0
    %195 = vmatpush1.msra.mxu0 %v163
    %196 = vmatprep.subr.mxu0 0.0
    %197 = vmatpush1.msra.mxu0 %v164
    %198 = vmatprep.subr.mxu0 0.0
    %199 = vmatpush1.msra.mxu0 %v165
    %200 = vmatprep.subr.mxu0 0.0
    %201 = vmatpush1.msra.mxu0 %v166
    %202 = vmatprep.subr.mxu0 0.0
    %203 = vmatpush1.msra.mxu0 %v167
    %204 = vmatprep.subr.mxu0 0.0
    %205 = vmatpush1.msra.mxu0 %v168
    %206 = vmatprep.subr.mxu0 0.0
    %207 = vmatpush1.msra.mxu0 %v169
    %208 = vmatprep.subr.mxu0 0.0
    %209 = vmatpush1.msra.mxu0 %v170
    %210 = vmatprep.subr.mxu0 0.0
    %211 = vmatpush1.msra.mxu0 0.0
    %212 = vmatprep.subr.mxu0 0.0
    %213 = vmatpush1.msra.mxu0 0.0
    %214 = vmatprep.subr.mxu0 0.0
    %215 = vmatpush1.msra.mxu0 0.0
    %216 = vmatprep.subr.mxu0 0.0
    %217 = vmatpush1.msra.mxu0 0.0
    %218 = vmatprep.subr.mxu0 0.0
    %219 = vmatpush1.msra.mxu0 0.0
    %220 = vmatprep.subr.mxu0 0.0
    %221 = vmatpush1.msra.mxu0 0.0
    %222 = vmatprep.subr.mxu0 0.0
    %223 = vmatpush1.msra.mxu0 0.0
    %224 = vmatprep.subr.mxu0 0.0
    %225 = vmatpush1.msra.mxu0 0.0
    %226 = vmatprep.subr.mxu0 0.0
    %227 = vmatpush1.msra.mxu0 0.0
    %228 = vmatprep.subr.mxu0 0.0
    %229 = vmatpush1.msra.mxu0 0.0
    %230 = vmatprep.subr.mxu0 0.0
    %231 = vmatpush1.msra.mxu0 0.0
    %232 = vmatprep.subr.mxu0 0.0
    %233 = vmatpush1.msra.mxu0 0.0
    %234 = vmatprep.subr.mxu0 0.0
    %235 = vmatpush1.msra.mxu0 0.0
    %236 = vmatprep.subr.mxu0 0.0
    %237 = vmatpush1.msra.mxu0 0.0
    %238 = vmatprep.subr.mxu0 0.0
    %239 = vmatpush1.msra.mxu0 0.0
    %240 = vmatprep.subr.mxu0 0.0
    %241 = vmatpush1.msra.mxu0 0.0
    %242 = vmatprep.mubr.f32.mxu0 0.0
    %243 = vmatmul.mubr.f32.gmra.mrb[0].mxu0 %v154
    %v244 = vpop.f32.mrb[0].mxu0
    %v245 = vadd.f32 %v176, %v244
    %v246 = vpop.f32.mrb[0].mxu0
    %247 = vdwg.mxu0
    %248 = vst [vmem:[#allocation8] sm:$0xff] %v245
    // Predicated region
    $region34: #{tpu_custom_call.1} parent=1 // pred_check
      _
    $region35: #{tpu_custom_call.1} parent=1 // pred_check_branch
      %250 = sbr.rel (0) target = $region37
    $region36: #{tpu_custom_call.1} parent=1 // pred_region
      %s252 = ssub.s32 128, 128
      %253 = vsyncadd [#allocation4], %s252
      %s255 = sshll.u32 [#allocation8], 4
      %s256 = int_to_ptr.vmem [resolvable:$true] %s255
      %258 = dma.vmem_to_hbm [thread:$0]  %s256, 128, %s5, [#allocation4]
    $region37: #{tpu_custom_call.1} parent=1 // pred_fallthru
      _
    // Predicated region
    $region38: #{tpu_custom_call.1} parent=1 // pred_check
      _
    $region39: #{tpu_custom_call.1} parent=1 // pred_check_branch
      %260 = sbr.rel (0) target = $region41
    $region40: #{tpu_custom_call.1} parent=1 // pred_region
      %261 = dma.done [#allocation4], 128
    $region41: #{tpu_custom_call.1} parent=1 // pred_fallthru
      _
    %262 = vsyncpa [#allocation3], 1
    %263 = vsyncpa [#allocation6], 1
    %264 = vsyncpa [#allocation4], 1

</llo_original>
